<compile_context>
chip_gen: v5e
topology: v5e:2x2
jax: 0.10.0
libtpu: 0.0.40
codegen_flags: <defaults>
</compile_context>

<pallas_src>
import functools
import math

import jax
import jax.numpy as jnp
from jax import lax
from jax.experimental import pallas as pl
from jax.experimental.pallas import tpu as pltpu

EPS = 1e-6
TILE_M = 256          # row tile for M = B*T gridded kernels
RET_TILE = 256        # query / kv chunk length for the retention kernel
TILE_I = 512          # intermediate-dim tile for the MLP kernel
VMEM_LIMIT_BYTES = 48 * 1024 * 1024   # explicit scoped-VMEM limit (fits v5e/v6e/v7x)


def _row_tile(m):
    return min(TILE_M, m)


def _divisor_tile(n, pref):
    """Largest divisor of n that is <= pref."""
    t = min(pref, n)
    while n % t:
        t -= 1
    return t


# ----------------------------- Pallas kernels ------------------------------

def _norm_qkvg_rope_kernel(x_ref, nw_ref, w_ref, cos_ref, sin_ref,
                           q_ref, k_ref, v_ref, g_ref, *, nh, dk, kd, vd, eps):
    # attn_norm RMSNorm (f32) -> bf16 -> one fused QKVG matmul -> RoPE on q/k.
    x = x_ref[...]                                            # (tm, H) f32
    tm = x.shape[0]
    var = jnp.mean(x * x, axis=-1, keepdims=True)
    xn = (x * lax.rsqrt(var + eps) * nw_ref[...]).astype(jnp.bfloat16)
    y = jnp.dot(xn, w_ref[...], preferred_element_type=jnp.float32)  # (tm, 2kd+2vd)

    q = y[:, :kd]
    k = y[:, kd:2 * kd]
    v = y[:, 2 * kd:2 * kd + vd]
    g = y[:, 2 * kd + vd:]

    cos = cos_ref[...]                                        # (tm, dk) full-width
    sin_sgn = sin_ref[...]                                    # (tm, dk) = [-sin, sin]
    half = dk // 2

    def rope(a):
        # non-interleaved rotary: out = a * cos + rotate_half(a) * sin_signed
        a3 = a.reshape(tm, nh, dk)
        rot = jnp.concatenate([a3[:, :, half:], a3[:, :, :half]], axis=-1)
        out = a3 * cos[:, None, :] + rot * sin_sgn[:, None, :]
        return out.reshape(tm, kd)

    q_ref[...] = rope(q).astype(jnp.bfloat16)
    k_ref[...] = rope(k).astype(jnp.bfloat16)
    v_ref[...] = v.astype(jnp.bfloat16)
    g_ref[...] = g.astype(jnp.bfloat16)


def _retention_kernel(q_ref, k_ref, v_ref, o_ref, acc_ref, *, nh, dk, dv, scale):
    # grid = (B, QT, KT); f32 accumulator lives in VMEM scratch, bf16 output
    # is written once at the diagonal (last computed) KV step.
    qi = pl.program_id(1)
    kj = pl.program_id(2)
    tq = q_ref.shape[1]
    tk = k_ref.shape[1]                                       # tq == tk

    @pl.when(kj == 0)
    def _():
        acc_ref[...] = jnp.zeros_like(acc_ref)

    def accumulate(is_diag):
        ti = lax.broadcasted_iota(jnp.float32, (tq, 1), 0)    # chunk-relative t'
        si = lax.broadcasted_iota(jnp.float32, (tk, 1), 0)    # chunk-relative s'
        base = ((qi - kj) * tq).astype(jnp.float32)           # chunk offset
        if is_diag:
            causal = (lax.broadcasted_iota(jnp.int32, (tq, tk), 0) >=
                      lax.broadcasted_iota(jnp.int32, (tq, tk), 1))
        for h in range(nh):
            # per-head decay gamma_h = 1 - 2^(-5-h); factorized into row scalings
            lg = math.log(1.0 - 2.0 ** (-5.0 - h))
            q_scale = jnp.exp(lg * (ti + base)) * scale       # (tq,1) f32, <= scale
            k_scale = jnp.exp(-lg * si)                       # (tk,1) f32, bounded
            qh = (q_ref[0, :, h * dk:(h + 1) * dk].astype(jnp.float32)
                  * q_scale).astype(jnp.bfloat16)
            kh = (k_ref[0, :, h * dk:(h + 1) * dk].astype(jnp.float32)
                  * k_scale).astype(jnp.bfloat16)
            s = lax.dot_general(qh, kh, (((1,), (1,)), ((), ())),
                                preferred_element_type=jnp.float32)
            if is_diag:
                s = jnp.where(causal, s, 0.0)
            pv = jnp.dot(s.astype(jnp.bfloat16), v_ref[0, :, h * dv:(h + 1) * dv],
                         preferred_element_type=jnp.float32)
            acc_ref[:, h * dv:(h + 1) * dv] += pv

    @pl.when(kj < qi)                       # strictly-past chunks: no mask needed
    def _():
        accumulate(False)

    @pl.when(kj == qi)                      # diagonal chunk: causal mask + store
    def _():
        accumulate(True)
        o_ref[0] = acc_ref[...].astype(o_ref.dtype)


def _gate_oproj_addnorm_kernel(o_ref, g_ref, res_ref, gw_ref, mw_ref, wo_ref,
                               h2_ref, res2_ref, y_scr, *, nh, dv, eps):
    # FusedRMSNormSwishGate (per head, f32) + o_proj + residual add + mlp_norm.
    gw = gw_ref[...]                                          # (1, dv) f32
    for h in range(nh):
        sl = slice(h * dv, (h + 1) * dv)
        oh = o_ref[:, sl].astype(jnp.float32)
        gh = g_ref[:, sl].astype(jnp.float32)
        var = jnp.mean(oh * oh, axis=-1, keepdims=True)
        yh = oh * lax.rsqrt(var + eps) * gw * (gh * jax.nn.sigmoid(gh))
        y_scr[:, sl] = yh.astype(jnp.bfloat16)                # one head live at a time
    attn = jnp.dot(y_scr[...], wo_ref[...], preferred_element_type=jnp.float32)

    z = attn + res_ref[...]                                   # new residual (f32)
    res2_ref[...] = z
    var = jnp.mean(z * z, axis=-1, keepdims=True)
    h2_ref[...] = (z * lax.rsqrt(var + eps) * mw_ref[...]).astype(h2_ref.dtype)


def _mlp_kernel(x_ref, res_ref, wg_ref, wu_ref, wd_ref, o_ref):
    # RetNetMLP swiglu, tiled over the intermediate dim; o_ref is the revisited
    # f32 accumulator, initialized with the residual at the first I-tile.
    j = pl.program_id(1)

    @pl.when(j == 0)
    def _():
        o_ref[...] = res_ref[...]

    x = x_ref[...]                                            # (tm, H) bf16
    gate = jnp.dot(x, wg_ref[...], preferred_element_type=jnp.float32)
    up = jnp.dot(x, wu_ref[...], preferred_element_type=jnp.float32)
    hmid = ((gate * jax.nn.sigmoid(gate)) * up).astype(jnp.bfloat16)
    o_ref[...] += jnp.dot(hmid, wd_ref[...], preferred_element_type=jnp.float32)


# ----------------------------- wrappers -------------------------------------

def norm_qkvg_rope(xf, cos_t, sin_t, w_norm, w_qkvg, *, nh, dk, dv):
    m, hdim = xf.shape
    kd, vd = nh * dk, nh * dv
    nout = w_qkvg.shape[1]
    tm = _row_tile(m)
    kern = functools.partial(_norm_qkvg_rope_kernel,
                             nh=nh, dk=dk, kd=kd, vd=vd, eps=EPS)
    return pl.pallas_call(
        kern,
        out_shape=(jax.ShapeDtypeStruct((m, kd), jnp.bfloat16),
                   jax.ShapeDtypeStruct((m, kd), jnp.bfloat16),
                   jax.ShapeDtypeStruct((m, vd), jnp.bfloat16),
                   jax.ShapeDtypeStruct((m, vd), jnp.bfloat16)),
        grid=(pl.cdiv(m, tm),),
        in_specs=[pl.BlockSpec((tm, hdim), lambda i: (i, 0)),
                  pl.BlockSpec((1, hdim), lambda i: (0, 0)),
                  pl.BlockSpec((hdim, nout), lambda i: (0, 0)),
                  pl.BlockSpec((tm, dk), lambda i: (i, 0)),
                  pl.BlockSpec((tm, dk), lambda i: (i, 0))],
        out_specs=(pl.BlockSpec((tm, kd), lambda i: (i, 0)),
                   pl.BlockSpec((tm, kd), lambda i: (i, 0)),
                   pl.BlockSpec((tm, vd), lambda i: (i, 0)),
                   pl.BlockSpec((tm, vd), lambda i: (i, 0))),
        compiler_params=pltpu.CompilerParams(
            dimension_semantics=("parallel",),
            vmem_limit_bytes=VMEM_LIMIT_BYTES),
    )(xf, w_norm, w_qkvg, cos_t, sin_t)


def retention(q, k, v, *, nh, dk, dv, scale):
    b, t, kd = q.shape
    vd = v.shape[-1]
    tile = _divisor_tile(t, min(RET_TILE, t))
    if tile % 8 and tile != t:
        tile = t       # TODO(synk): pad T for awkward sequence lengths
    nt = t // tile
    kern = functools.partial(_retention_kernel, nh=nh, dk=dk, dv=dv, scale=scale)
    return pl.pallas_call(
        kern,
        out_shape=jax.ShapeDtypeStruct((b, t, vd), jnp.bfloat16),
        grid=(b, nt, nt),
        in_specs=[
            pl.BlockSpec((1, tile, kd), lambda bi, i, j: (bi, i, 0)),
            # clamp to the causal region: skipped future KV chunks issue no DMA
            pl.BlockSpec((1, tile, kd), lambda bi, i, j: (bi, jnp.minimum(j, i), 0)),
            pl.BlockSpec((1, tile, vd), lambda bi, i, j: (bi, jnp.minimum(j, i), 0))],
        out_specs=pl.BlockSpec((1, tile, vd), lambda bi, i, j: (bi, i, 0)),
        scratch_shapes=[pltpu.VMEM((tile, vd), jnp.float32)],
        compiler_params=pltpu.CompilerParams(
            dimension_semantics=("parallel", "parallel", "arbitrary"),
            vmem_limit_bytes=VMEM_LIMIT_BYTES),
    )(q, k, v)


def gate_oproj_addnorm(o, g, res, g_norm_w, mlp_norm_w, w_o, *, nh, dv):
    m, vd = o.shape
    hdim = res.shape[1]
    tm = _row_tile(m)
    kern = functools.partial(_gate_oproj_addnorm_kernel, nh=nh, dv=dv, eps=EPS)
    return pl.pallas_call(
        kern,
        out_shape=(jax.ShapeDtypeStruct((m, hdim), jnp.bfloat16),
                   jax.ShapeDtypeStruct((m, hdim), jnp.float32)),
        grid=(pl.cdiv(m, tm),),
        in_specs=[pl.BlockSpec((tm, vd), lambda i: (i, 0)),
                  pl.BlockSpec((tm, vd), lambda i: (i, 0)),
                  pl.BlockSpec((tm, hdim), lambda i: (i, 0)),
                  pl.BlockSpec((1, dv), lambda i: (0, 0)),
                  pl.BlockSpec((1, hdim), lambda i: (0, 0)),
                  pl.BlockSpec((vd, hdim), lambda i: (0, 0))],
        out_specs=(pl.BlockSpec((tm, hdim), lambda i: (i, 0)),
                   pl.BlockSpec((tm, hdim), lambda i: (i, 0))),
        scratch_shapes=[pltpu.VMEM((tm, vd), jnp.bfloat16)],
        compiler_params=pltpu.CompilerParams(
            dimension_semantics=("parallel",),
            vmem_limit_bytes=VMEM_LIMIT_BYTES),
    )(o, g, res, g_norm_w, mlp_norm_w, w_o)


def mlp_residual(h2, res2, w_gate, w_up, w_down):
    m, hdim = res2.shape
    inter = w_gate.shape[1]
    tm = _row_tile(m)
    tn = _divisor_tile(inter, min(TILE_I, inter))   # inter is a multiple of 256
    return pl.pallas_call(
        _mlp_kernel,
        out_shape=jax.ShapeDtypeStruct((m, hdim), jnp.float32),
        grid=(pl.cdiv(m, tm), inter // tn),
        in_specs=[pl.BlockSpec((tm, hdim), lambda i, j: (i, 0)),
                  pl.BlockSpec((tm, hdim), lambda i, j: (i, 0)),
                  pl.BlockSpec((hdim, tn), lambda i, j: (0, j)),
                  pl.BlockSpec((hdim, tn), lambda i, j: (0, j)),
                  pl.BlockSpec((tn, hdim), lambda i, j: (j, 0))],
        out_specs=pl.BlockSpec((tm, hdim), lambda i, j: (i, 0)),
        compiler_params=pltpu.CompilerParams(
            dimension_semantics=("parallel", "arbitrary"),
            vmem_limit_bytes=VMEM_LIMIT_BYTES),
    )(h2, res2, w_gate, w_up, w_down)


# ----------------------------- full block -----------------------------------

def prepare_params(raw, num_heads):
    """One-time weight prep: concat QKVG, transpose to (in, out), cast to bf16."""
    kd = raw["wq"].shape[0]
    vd = raw["wv"].shape[0]
    hdim = raw["wq"].shape[1]
    inter = raw["w_down"].shape[1]
    w_qkvg = jnp.concatenate(
        [raw["wq"], raw["wk"], raw["wv"], raw["wg"]], axis=0).T.astype(jnp.bfloat16)
    w_gate_full = raw["w_gate"]                       # (2I, H) torch layout
    return {
        "num_heads": num_heads,
        "head_k_dim": kd // num_heads,
        "head_v_dim": vd // num_heads,
        "attn_norm_w": raw["attn_norm_w"].reshape(1, hdim).astype(jnp.float32),
        "mlp_norm_w": raw["mlp_norm_w"].reshape(1, hdim).astype(jnp.float32),
        "g_norm_w": raw["g_norm_w"].reshape(1, vd // num_heads).astype(jnp.float32),
        "w_qkvg": w_qkvg,                             # (H, 2*kd + 2*vd)
        "w_o": raw["wo"].T.astype(jnp.bfloat16),      # (value_dim, H)
        "w_gate": w_gate_full[:inter].T.astype(jnp.bfloat16),   # (H, I)  torch chunk[0]
        "w_up": w_gate_full[inter:].T.astype(jnp.bfloat16),     # (H, I)  torch chunk[1]
        "w_down": raw["w_down"].T.astype(jnp.bfloat16),          # (I, H)
    }


def retnet_block(x, p):
    b, t, hdim = x.shape
    nh = p["num_heads"]
    dk, dv = p["head_k_dim"], p["head_v_dim"]
    kd, vd = nh * dk, nh * dv
    m = b * t
    xf = x.reshape(m, hdim)

    # rotary tables: full per-head width with the rotate-half sign baked in,
    # so K1 needs a single FMA (tiny vs. the H-dim traffic).
    inv_freq = 1.0 / (10000.0 ** (jnp.arange(0, dk, 2, dtype=jnp.float32) / dk))
    freqs = jnp.arange(t, dtype=jnp.float32)[:, None] * inv_freq[None, :]  # (T, dk/2)
    cos_h, sin_h = jnp.cos(freqs), jnp.sin(freqs)
    cos_t = jnp.tile(jnp.concatenate([cos_h, cos_h], axis=-1), (b, 1))     # (M, dk)
    sin_t = jnp.tile(jnp.concatenate([-sin_h, sin_h], axis=-1), (b, 1))    # (M, dk)

    # K1: attn_norm + fused QKVG projection + RoPE
    q, k, v, g = norm_qkvg_rope(xf, cos_t, sin_t, p["attn_norm_w"], p["w_qkvg"],
                                nh=nh, dk=dk, dv=dv)

    # K2: chunked retention with factorized per-head decay (row scalings only)
    o = retention(q.reshape(b, t, kd), k.reshape(b, t, kd), v.reshape(b, t, vd),
                  nh=nh, dk=dk, dv=dv, scale=float(dk) ** -0.5)

    # K3: gated per-head RMSNorm + o_proj + residual add + mlp_norm
    h2, res2 = gate_oproj_addnorm(o.reshape(m, vd), g, xf,
                                  p["g_norm_w"], p["mlp_norm_w"], p["w_o"],
                                  nh=nh, dv=dv)

    # K4: swiglu MLP (split gate/up, I-tiled) + final residual add
    out = mlp_residual(h2, res2, p["w_gate"], p["w_up"], p["w_down"])
    return out.reshape(b, t, hdim)


# ----------------------------- main ------------------------------------------

if __name__ == "__main__":
    # small shapes consistent with the module
    B, T, H = 2, 8, 32
    NH = 2                      # num_heads (num_kv_heads == num_heads)
    expand_k, expand_v = 1, 2   # RetNetConfig defaults
    key_dim = H * expand_k
    value_dim = H * expand_v
    Dk, Dv = key_dim // NH, value_dim // NH
    hidden_ratio = 4
    inter = int(H * hidden_ratio * 2 / 3)
    inter = 256 * ((inter + 256 - 1) // 256)    # -> 256

    key = jax.random.PRNGKey(0)
    ks = jax.random.split(key, 8)

    def init_w(k, shape):
        return jax.random.normal(k, shape, jnp.float32) * 0.02

    raw_params = {
        "attn_norm_w": jnp.ones((H,), jnp.float32),
        "mlp_norm_w": jnp.ones((H,), jnp.float32),
        "g_norm_w": jnp.ones((Dv,), jnp.float32),
        "wq": init_w(ks[0], (key_dim, H)),
        "wk": init_w(ks[1], (key_dim, H)),
        "wv": init_w(ks[2], (value_dim, H)),
        "wg": init_w(ks[3], (value_dim, H)),
        "wo": init_w(ks[4], (H, value_dim)),
        "w_gate": init_w(ks[5], (2 * inter, H)),
        "w_down": init_w(ks[6], (H, inter)),
    }
    params = prepare_params(raw_params, NH)
    x = jax.random.normal(ks[7], (B, T, H), jnp.float32)

    out = retnet_block(x, params)
    jax.block_until_ready(out)
    assert out.shape == (B, T, H)
    assert bool(jnp.all(jnp.isfinite(out)))
    print("KERNEL_OK")
</pallas_src>

<mosaic_0001>
module attributes {stable_mosaic.version = 11 : i64} {
  func.func @_norm_qkvg_rope_kernel(%arg0: i32, %arg1: memref<16x32xf32, #tpu.memory_space<vmem>>, %arg2: memref<1x32xf32, #tpu.memory_space<vmem>>, %arg3: memref<32x192xbf16, #tpu.memory_space<vmem>>, %arg4: memref<16x16xf32, #tpu.memory_space<vmem>>, %arg5: memref<16x16xf32, #tpu.memory_space<vmem>>, %arg6: memref<16x32xbf16, #tpu.memory_space<vmem>>, %arg7: memref<16x32xbf16, #tpu.memory_space<vmem>>, %arg8: memref<16x64xbf16, #tpu.memory_space<vmem>>, %arg9: memref<16x64xbf16, #tpu.memory_space<vmem>>) attributes {dimension_semantics = [#tpu.dimension_semantics<parallel>], iteration_bounds = array<i64: 1>, scalar_prefetch = 0 : i64, scratch_operands = 0 : i64, tpu.core_type = #tpu.core_type<tc>, window_params = [{transform_indices = @transform_0, window_bounds = array<i64: 16, 32>}, {pipeline_mode = #tpu.pipeline_mode<synchronous>, transform_indices = @transform_1, window_bounds = array<i64: 1, 32>}, {pipeline_mode = #tpu.pipeline_mode<synchronous>, transform_indices = @transform_2, window_bounds = array<i64: 32, 192>}, {transform_indices = @transform_3, window_bounds = array<i64: 16, 16>}, {transform_indices = @transform_4, window_bounds = array<i64: 16, 16>}, {transform_indices = @transform_5, window_bounds = array<i64: 16, 32>}, {transform_indices = @transform_6, window_bounds = array<i64: 16, 32>}, {transform_indices = @transform_7, window_bounds = array<i64: 16, 64>}, {transform_indices = @transform_8, window_bounds = array<i64: 16, 64>}]} {
    %c0 = arith.constant 0 : index
    %c0_0 = arith.constant 0 : index
    %0 = vector.load %arg1[%c0, %c0_0] : memref<16x32xf32, #tpu.memory_space<vmem>>, vector<16x32xf32>
    %1 = arith.mulf %0, %0 : vector<16x32xf32>
    %cst = arith.constant dense<0.000000e+00> : vector<16xf32>
    %2 = vector.multi_reduction <add>, %1, %cst [1] : vector<16x32xf32> to vector<16xf32>
    %3 = vector.shape_cast %2 : vector<16xf32> to vector<16x1xf32>
    %cst_1 = arith.constant 3.200000e+01 : f32
    %4 = vector.broadcast %cst_1 : f32 to vector<16x1xf32>
    %5 = arith.divf %3, %4 : vector<16x1xf32>
    %cst_2 = arith.constant 9.99999997E-7 : f32
    %6 = vector.broadcast %cst_2 : f32 to vector<16x1xf32>
    %7 = arith.addf %5, %6 : vector<16x1xf32>
    %8 = math.rsqrt %7 : vector<16x1xf32>
    %9 = vector.broadcast %8 : vector<16x1xf32> to vector<16x32xf32>
    %10 = arith.mulf %0, %9 : vector<16x32xf32>
    %c0_3 = arith.constant 0 : index
    %c0_4 = arith.constant 0 : index
    %11 = vector.load %arg2[%c0_3, %c0_4] : memref<1x32xf32, #tpu.memory_space<vmem>>, vector<1x32xf32>
    %12 = vector.broadcast %11 : vector<1x32xf32> to vector<16x32xf32>
    %13 = arith.mulf %10, %12 : vector<16x32xf32>
    %14 = arith.truncf %13 : vector<16x32xf32> to vector<16x32xbf16>
    %c0_5 = arith.constant 0 : index
    %c0_6 = arith.constant 0 : index
    %15 = vector.load %arg3[%c0_5, %c0_6] : memref<32x192xbf16, #tpu.memory_space<vmem>>, vector<32x192xbf16>
    %cst_7 = arith.constant dense<0.000000e+00> : vector<16x192xf32>
    %16 = tpu.matmul %14, %15, %cst_7 {dimension_numbers = #tpu.dot_dimension_numbers<[1], [0], [0], [1], [0, 0, 1, 1], [], []>} : vector<16x32xbf16>, vector<32x192xbf16>, vector<16x192xf32> -> vector<16x192xf32>
    %17 = vector.extract_strided_slice %16 {offsets = [0, 0], sizes = [16, 32], strides = [1, 1]} : vector<16x192xf32> to vector<16x32xf32>
    %18 = vector.extract_strided_slice %16 {offsets = [0, 32], sizes = [16, 32], strides = [1, 1]} : vector<16x192xf32> to vector<16x32xf32>
    %19 = vector.extract_strided_slice %16 {offsets = [0, 64], sizes = [16, 64], strides = [1, 1]} : vector<16x192xf32> to vector<16x64xf32>
    %20 = vector.extract_strided_slice %16 {offsets = [0, 128], sizes = [16, 64], strides = [1, 1]} : vector<16x192xf32> to vector<16x64xf32>
    %c0_8 = arith.constant 0 : index
    %c0_9 = arith.constant 0 : index
    %21 = vector.load %arg4[%c0_8, %c0_9] : memref<16x16xf32, #tpu.memory_space<vmem>>, vector<16x16xf32>
    %c0_10 = arith.constant 0 : index
    %c0_11 = arith.constant 0 : index
    %22 = vector.load %arg5[%c0_10, %c0_11] : memref<16x16xf32, #tpu.memory_space<vmem>>, vector<16x16xf32>
    %23 = vector.shape_cast %17 : vector<16x32xf32> to vector<16x2x16xf32>
    %24 = vector.extract_strided_slice %23 {offsets = [0, 0, 8], sizes = [16, 2, 8], strides = [1, 1, 1]} : vector<16x2x16xf32> to vector<16x2x8xf32>
    %25 = vector.extract_strided_slice %23 {offsets = [0, 0, 0], sizes = [16, 2, 8], strides = [1, 1, 1]} : vector<16x2x16xf32> to vector<16x2x8xf32>
    %26 = tpu.concatenate %24, %25 in 2 : vector<16x2x8xf32>, vector<16x2x8xf32> -> vector<16x2x16xf32>
    %27 = vector.shape_cast %21 : vector<16x16xf32> to vector<16x1x16xf32>
    %28 = vector.broadcast %27 : vector<16x1x16xf32> to vector<16x2x16xf32>
    %29 = arith.mulf %23, %28 : vector<16x2x16xf32>
    %30 = vector.shape_cast %22 : vector<16x16xf32> to vector<16x1x16xf32>
    %31 = vector.broadcast %30 : vector<16x1x16xf32> to vector<16x2x16xf32>
    %32 = arith.mulf %26, %31 : vector<16x2x16xf32>
    %33 = arith.addf %29, %32 : vector<16x2x16xf32>
    %34 = vector.shape_cast %33 : vector<16x2x16xf32> to vector<16x32xf32>
    %35 = arith.truncf %34 : vector<16x32xf32> to vector<16x32xbf16>
    %c0_12 = arith.constant 0 : index
    %c0_13 = arith.constant 0 : index
    %36 = vector.load %arg6[%c0_12, %c0_13] : memref<16x32xbf16, #tpu.memory_space<vmem>>, vector<16x32xbf16>
    tpu.vector_store %arg6[%c0_12, %c0_13], %35 {strides = array<i32>} : memref<16x32xbf16, #tpu.memory_space<vmem>>, vector<16x32xbf16>,
    %37 = vector.shape_cast %18 : vector<16x32xf32> to vector<16x2x16xf32>
    %38 = vector.extract_strided_slice %37 {offsets = [0, 0, 8], sizes = [16, 2, 8], strides = [1, 1, 1]} : vector<16x2x16xf32> to vector<16x2x8xf32>
    %39 = vector.extract_strided_slice %37 {offsets = [0, 0, 0], sizes = [16, 2, 8], strides = [1, 1, 1]} : vector<16x2x16xf32> to vector<16x2x8xf32>
    %40 = tpu.concatenate %38, %39 in 2 : vector<16x2x8xf32>, vector<16x2x8xf32> -> vector<16x2x16xf32>
    %41 = vector.shape_cast %21 : vector<16x16xf32> to vector<16x1x16xf32>
    %42 = vector.broadcast %41 : vector<16x1x16xf32> to vector<16x2x16xf32>
    %43 = arith.mulf %37, %42 : vector<16x2x16xf32>
    %44 = vector.shape_cast %22 : vector<16x16xf32> to vector<16x1x16xf32>
    %45 = vector.broadcast %44 : vector<16x1x16xf32> to vector<16x2x16xf32>
    %46 = arith.mulf %40, %45 : vector<16x2x16xf32>
    %47 = arith.addf %43, %46 : vector<16x2x16xf32>
    %48 = vector.shape_cast %47 : vector<16x2x16xf32> to vector<16x32xf32>
    %49 = arith.truncf %48 : vector<16x32xf32> to vector<16x32xbf16>
    %c0_14 = arith.constant 0 : index
    %c0_15 = arith.constant 0 : index
    %50 = vector.load %arg7[%c0_14, %c0_15] : memref<16x32xbf16, #tpu.memory_space<vmem>>, vector<16x32xbf16>
    tpu.vector_store %arg7[%c0_14, %c0_15], %49 {strides = array<i32>} : memref<16x32xbf16, #tpu.memory_space<vmem>>, vector<16x32xbf16>,
    %51 = arith.truncf %19 : vector<16x64xf32> to vector<16x64xbf16>
    %c0_16 = arith.constant 0 : index
    %c0_17 = arith.constant 0 : index
    %52 = vector.load %arg8[%c0_16, %c0_17] : memref<16x64xbf16, #tpu.memory_space<vmem>>, vector<16x64xbf16>
    tpu.vector_store %arg8[%c0_16, %c0_17], %51 {strides = array<i32>} : memref<16x64xbf16, #tpu.memory_space<vmem>>, vector<16x64xbf16>,
    %53 = arith.truncf %20 : vector<16x64xf32> to vector<16x64xbf16>
    %c0_18 = arith.constant 0 : index
    %c0_19 = arith.constant 0 : index
    %54 = vector.load %arg9[%c0_18, %c0_19] : memref<16x64xbf16, #tpu.memory_space<vmem>>, vector<16x64xbf16>
    tpu.vector_store %arg9[%c0_18, %c0_19], %53 {strides = array<i32>} : memref<16x64xbf16, #tpu.memory_space<vmem>>, vector<16x64xbf16>,
    return
  }
  func.func @transform_0(%arg0: i32) -> (i32, i32) {
    %c0_i32 = arith.constant 0 : i32
    %c0_i32_0 = arith.constant 0 : i32
    return %arg0, %c0_i32 : i32, i32
  }
  func.func @transform_1(%arg0: i32) -> (i32, i32) {
    %c0_i32 = arith.constant 0 : i32
    %c0_i32_0 = arith.constant 0 : i32
    %c0_i32_1 = arith.constant 0 : i32
    return %c0_i32, %c0_i32_0 : i32, i32
  }
  func.func @transform_2(%arg0: i32) -> (i32, i32) {
    %c0_i32 = arith.constant 0 : i32
    %c0_i32_0 = arith.constant 0 : i32
    %c0_i32_1 = arith.constant 0 : i32
    return %c0_i32, %c0_i32_0 : i32, i32
  }
  func.func @transform_3(%arg0: i32) -> (i32, i32) {
    %c0_i32 = arith.constant 0 : i32
    %c0_i32_0 = arith.constant 0 : i32
    return %arg0, %c0_i32 : i32, i32
  }
  func.func @transform_4(%arg0: i32) -> (i32, i32) {
    %c0_i32 = arith.constant 0 : i32
    %c0_i32_0 = arith.constant 0 : i32
    return %arg0, %c0_i32 : i32, i32
  }
  func.func @transform_5(%arg0: i32) -> (i32, i32) {
    %c0_i32 = arith.constant 0 : i32
    %c0_i32_0 = arith.constant 0 : i32
    return %arg0, %c0_i32 : i32, i32
  }
  func.func @transform_6(%arg0: i32) -> (i32, i32) {
    %c0_i32 = arith.constant 0 : i32
    %c0_i32_0 = arith.constant 0 : i32
    return %arg0, %c0_i32 : i32, i32
  }
  func.func @transform_7(%arg0: i32) -> (i32, i32) {
    %c0_i32 = arith.constant 0 : i32
    %c0_i32_0 = arith.constant 0 : i32
    return %arg0, %c0_i32 : i32, i32
  }
  func.func @transform_8(%arg0: i32) -> (i32, i32) {
    %c0_i32 = arith.constant 0 : i32
    %c0_i32_0 = arith.constant 0 : i32
    return %arg0, %c0_i32 : i32, i32
  }
}

</mosaic_0001>

<llo_original>
// kernel: tpu_custom_call.1
$region0: #{tpu_custom_call.1}
  #allocation0 [shape = 'u32[]', space=smem, size = 0x4, offset = 0x4, fixed_abs, tag = 'smem constant byte address 0x4 - core index']
  #allocation1 [shape = 'u32[72,128]{1,0:T(1,128)}', space=vmem, size = 0x9000, scoped, tag = 'internal scratch']
  %s0 = inlined_call_operand.hbm [shape: f32[16,32], index: 0, kind: input, shape index: {}]
  %s1 = inlined_call_operand.hbm [shape: f32[1,32], index: 1, kind: input, shape index: {}]
  %s2 = inlined_call_operand.hbm [shape: bf16[32,192], index: 2, kind: input, shape index: {}]
  %s3 = inlined_call_operand.hbm [shape: f32[16,16], index: 3, kind: input, shape index: {}]
  %s4 = inlined_call_operand.hbm [shape: f32[16,16], index: 4, kind: input, shape index: {}]
  %s5 = inlined_call_operand.hbm [shape: bf16[16,32], index: 5, kind: output, shape index: {0}]
  %s6 = inlined_call_operand.hbm [shape: bf16[16,32], index: 6, kind: output, shape index: {1}]
  %s7 = inlined_call_operand.hbm [shape: bf16[16,64], index: 7, kind: output, shape index: {2}]
  %s8 = inlined_call_operand.hbm [shape: bf16[16,64], index: 8, kind: output, shape index: {3}]
  %9 = xla_tuple %s5, %s6, %s7, %s8
  %s10 = sld [smem:[#allocation0]]
  $region74: #{tpu_custom_call.1} parent=0
    _
  %s12 = ssub.s32 1, %s10
  %s13 = scalar_select 0, %s12, %s10
  $region1: #{tpu_custom_call.1} parent=0
    #allocation2 [shape = 'u8[8192]{0}', space=vmem, size = 0x2000, scoped, tag = 'input window, operand 0, single buffered']
    #allocation3 [shape = 's32[1]{0}', space=sflag, size = 0x4, scoped, tag = 'scoped memory for tpu_custom_call.1']
    #allocation4 [shape = 's32[1]{0}', space=sflag, size = 0x4, scoped, tag = 'scoped memory for tpu_custom_call.1']
    #allocation5 [shape = 'u8[512]{0}', space=vmem, size = 0x400, scoped, tag = 'input window, operand 1, single buffered']
    #allocation6 [shape = 's32[1]{0}', space=sflag, size = 0x4, scoped, tag = 'scoped memory for tpu_custom_call.1']
    #allocation7 [shape = 'u8[16384]{0}', space=vmem, size = 0x4000, scoped, tag = 'input window, operand 2, single buffered']
    #allocation8 [shape = 'u8[8192]{0}', space=vmem, size = 0x2000, scoped, tag = 'input window, operand 3, single buffered']
    #allocation9 [shape = 's32[1]{0}', space=sflag, size = 0x4, scoped, tag = 'scoped memory for tpu_custom_call.1']
    #allocation10 [shape = 'u8[8192]{0}', space=vmem, size = 0x2000, scoped, tag = 'input window, operand 4, single buffered']
    #allocation11 [shape = 'u8[4096]{0}', space=vmem, size = 0x1000, scoped, tag = 'output window, operand 0, single buffered']
    #allocation12 [shape = 'u8[4096]{0}', space=vmem, size = 0x1000, scoped, tag = 'output window, operand 1, single buffered']
    #allocation13 [shape = 's32[1]{0}', space=sflag, size = 0x4, scoped, tag = 'scoped memory for tpu_custom_call.1']
    #allocation14 [shape = 'u8[4096]{0}', space=vmem, size = 0x1000, scoped, tag = 'output window, operand 2, single buffered']
    #allocation15 [shape = 'u8[4096]{0}', space=vmem, size = 0x1000, scoped, tag = 'output window, operand 3, single buffered']
    #allocation16 [shape = 's32[1]{0}', space=sflag, size = 0x4, scoped, tag = 'scoped memory for tpu_custom_call.1']
    %14 = vsyncpa [#allocation3], 0
    %15 = vsyncpa [#allocation6], 0
    %16 = vsyncpa [#allocation9], 0
    %17 = vsyncpa [#allocation4], 0
    %18 = vsyncpa [#allocation13], 0
    %19 = vsyncpa [#allocation16], 0
    // Predicated region
    $region2: #{tpu_custom_call.1} parent=1 // pred_check
      _
    $region3: #{tpu_custom_call.1} parent=1 // pred_check_branch
      %21 = sbr.rel (0) target = $region5
    $region4: #{tpu_custom_call.1} parent=1 // pred_region
      %23 = vsyncadd [#allocation3], 0
      %s24 = sshll.u32 %s0, 4
      %s25 = int_to_ptr.hbm [resolvable:$true] %s24
      %s26 = sshll.u32 [#allocation2], 4
      %s27 = int_to_ptr.vmem [resolvable:$true] %s26
      %32 = dma.hbm_to_vmem [thread:$0]  %s25, 256, %s27, [#allocation3], 128, 128, 8
    $region5: #{tpu_custom_call.1} parent=1 // pred_fallthru
      _
    // Predicated region
    $region6: #{tpu_custom_call.1} parent=1 // pred_check
      _
    $region7: #{tpu_custom_call.1} parent=1 // pred_check_branch
      %34 = sbr.rel (0) target = $region9
    $region8: #{tpu_custom_call.1} parent=1 // pred_region
      %36 = vsyncadd [#allocation6], 0
      %s38 = sshll.u32 %s1, 4
      %s39 = int_to_ptr.hbm [resolvable:$true] %s38
      %s40 = sshll.u32 [#allocation5], 4
      %s41 = int_to_ptr.vmem [resolvable:$true] %s40
      %43 = dma.hbm_to_vmem [thread:$0]  %s39, 16, %s41, [#allocation6]
    $region9: #{tpu_custom_call.1} parent=1 // pred_fallthru
      _
    // Predicated region
    $region10: #{tpu_custom_call.1} parent=1 // pred_check
      _
    $region11: #{tpu_custom_call.1} parent=1 // pred_check_branch
      %45 = sbr.rel (0) target = $region13
    $region12: #{tpu_custom_call.1} parent=1 // pred_region
      %47 = vsyncadd [#allocation6], 0
      %s48 = sshll.u32 %s2, 4
      %s49 = int_to_ptr.hbm [resolvable:$true] %s48
      %s50 = sshll.u32 [#allocation7], 4
      %s51 = int_to_ptr.vmem [resolvable:$true] %s50
      %56 = dma.hbm_to_vmem [thread:$0]  %s49, 512, %s51, [#allocation6], 128, 128, 8
    $region13: #{tpu_custom_call.1} parent=1 // pred_fallthru
      _
    // Predicated region
    $region14: #{tpu_custom_call.1} parent=1 // pred_check
      _
    $region15: #{tpu_custom_call.1} parent=1 // pred_check_branch
      %58 = sbr.rel (0) target = $region17
    $region16: #{tpu_custom_call.1} parent=1 // pred_region
      %60 = vsyncadd [#allocation9], 0
      %s61 = sshll.u32 %s3, 4
      %s62 = int_to_ptr.hbm [resolvable:$true] %s61
      %s63 = sshll.u32 [#allocation8], 4
      %s64 = int_to_ptr.vmem [resolvable:$true] %s63
      %69 = dma.hbm_to_vmem [thread:$0]  %s62, 256, %s64, [#allocation9], 128, 128, 8
    $region17: #{tpu_custom_call.1} parent=1 // pred_fallthru
      _
    // Predicated region
    $region18: #{tpu_custom_call.1} parent=1 // pred_check
      _
    $region19: #{tpu_custom_call.1} parent=1 // pred_check_branch
      %71 = sbr.rel (0) target = $region21
    $region20: #{tpu_custom_call.1} parent=1 // pred_region
      %73 = vsyncadd [#allocation9], 0
      %s74 = sshll.u32 %s4, 4
      %s75 = int_to_ptr.hbm [resolvable:$true] %s74
      %s76 = sshll.u32 [#allocation10], 4
      %s77 = int_to_ptr.vmem [resolvable:$true] %s76
      %82 = dma.hbm_to_vmem [thread:$0]  %s75, 256, %s77, [#allocation9], 128, 128, 8
    $region21: #{tpu_custom_call.1} parent=1 // pred_fallthru
      _
    // Predicated region
    $region22: #{tpu_custom_call.1} parent=1 // pred_check
      _
    $region23: #{tpu_custom_call.1} parent=1 // pred_check_branch
      %84 = sbr.rel (0) target = $region25
    $region24: #{tpu_custom_call.1} parent=1 // pred_region
      %86 = dma.done [#allocation3], 256
    $region25: #{tpu_custom_call.1} parent=1 // pred_fallthru
      _
    // Predicated region
    $region26: #{tpu_custom_call.1} parent=1 // pred_check
      _
    $region27: #{tpu_custom_call.1} parent=1 // pred_check_branch
      %88 = sbr.rel (0) target = $region29
    $region28: #{tpu_custom_call.1} parent=1 // pred_region
      %90 = dma.done [#allocation6], 16
    $region29: #{tpu_custom_call.1} parent=1 // pred_fallthru
      _
    // Predicated region
    $region30: #{tpu_custom_call.1} parent=1 // pred_check
      _
    $region31: #{tpu_custom_call.1} parent=1 // pred_check_branch
      %92 = sbr.rel (0) target = $region33
    $region32: #{tpu_custom_call.1} parent=1 // pred_region
      %94 = dma.done [#allocation6], 512
    $region33: #{tpu_custom_call.1} parent=1 // pred_fallthru
      _
    // Predicated region
    $region34: #{tpu_custom_call.1} parent=1 // pred_check
      _
    $region35: #{tpu_custom_call.1} parent=1 // pred_check_branch
      %96 = sbr.rel (0) target = $region37
    $region36: #{tpu_custom_call.1} parent=1 // pred_region
      %98 = dma.done [#allocation9], 256
    $region37: #{tpu_custom_call.1} parent=1 // pred_fallthru
      _
    // Predicated region
    $region38: #{tpu_custom_call.1} parent=1 // pred_check
      _
    $region39: #{tpu_custom_call.1} parent=1 // pred_check_branch
      %100 = sbr.rel (0) target = $region41
    $region40: #{tpu_custom_call.1} parent=1 // pred_region
      %102 = dma.done [#allocation9], 256
    $region41: #{tpu_custom_call.1} parent=1 // pred_fallthru
      _
    %v104 = vld [vmem:[#allocation2] sm:$0xff]
    %v105 = vld [vmem:[#allocation2 + $0x8] sm:$0xff]
    %v106 = vmul.f32 %v104, %v104
    %v107 = vmul.f32 %v105, %v105
    %vm108 = vcmask 261120
    %v109 = vsel %vm108, %v106, 0.0
    %110 = vadd.xlane.f32.xlu0 %v109
    %v111 = vpop.xlane.xlu0 %110
    %v112 = vsel %vm108, %v107, 0.0
    %113 = vadd.xlane.f32.xlu0 %v112
    %v114 = vpop.xlane.xlu0 %113
    %v115 = vrcp.pop 32.0
    %v116 = vmul.f32 32.0, %v115
    %v117 = vsub.f32 1.0, %v116
    %v118 = vmul.f32 %v115, %v117
    %v119 = vadd.f32 %v115, %v118
    %vm120 = vweird.f32 %v115
    %v121 = vsel %vm120, %v115, %v119
    %v122 = vmul.f32 %v111, %v121
    %v123 = vmul.f32 %v114, %v121
    %v124 = vadd.f32 %v122, 1e-06
    %v125 = vadd.f32 %v123, 1e-06
    %v126 = vrsqrt.pop %v124
    %v127 = vmul.f32 %v126, %v124
    %v128 = vmul.f32 %v127, %v126
    %v129 = vmul.f32 0.5, %v128
    %v130 = vsub.f32 1.5, %v129
    %v131 = vmul.f32 %v126, %v130
    %vm132 = vweird.f32 %v124
    %vm133 = vweird.f32 %v126
    %vm134 = vmor %vm132, %vm133
    %v135 = vsel %vm134, %v126, %v131
    %v136 = vrsqrt.pop %v125
    %v137 = vmul.f32 %v136, %v125
    %v138 = vmul.f32 %v137, %v136
    %v139 = vmul.f32 0.5, %v138
    %v140 = vsub.f32 1.5, %v139
    %v141 = vmul.f32 %v136, %v140
    %vm142 = vweird.f32 %v125
    %vm143 = vweird.f32 %v136
    %vm144 = vmor %vm142, %vm143
    %v145 = vsel %vm144, %v136, %v141
    %v146 = vmul.f32 %v104, %v135
    %v147 = vmul.f32 %v105, %v145
    %v148 = vld [vmem:[#allocation5] sm:$0x1]
    %v150 = vperm.slane %v148, 0
    %v152 = vmul.f32 %v146, %v150
    %v153 = vmul.f32 %v147, %v150
    %v154 = vpack.c.bf16 %v153, %v152
    %v155 = vld [vmem:[#allocation7] sm:$0xff]
    %v156 = vld [vmem:[#allocation7 + $0x8] sm:$0xff]
    %v157 = vld [vmem:[#allocation7 + $0x10] sm:$0xff]
    %v158 = vld [vmem:[#allocation7 + $0x18] sm:$0xff]
    %v163 = vunpack.c.l.b16 %v155
    %v164 = vunpack.c.h.b16 %v155
    %v165 = vunpack.c.l.b16 %v156
    %v166 = vunpack.c.h.b16 %v156
    %v167 = vunpack.c.l.b16 %v157
    %v168 = vunpack.c.h.b16 %v157
    %v169 = vunpack.c.l.b16 %v158
    %v170 = vunpack.c.h.b16 %v158
    %v171 = vpack.c.b16 %v165, %v163
    %v172 = vpack.c.b16 %v166, %v164
    %v173 = vpack.c.b16 %v169, %v167
    %v174 = vpack.c.b16 %v170, %v168
    %v180 = vsel %vm108, %v154, 0
    %182 = vmatpush.bf16.msra.mxu0 0
    %183 = vmatpush.bf16.msra.mxu0 0
    %184 = vmatpush.bf16.msra.mxu0 0
    %185 = vmatpush.bf16.msra.mxu0 0
    %186 = vmatpush.bf16.msra.mxu0 0
    %187 = vmatpush.bf16.msra.mxu0 0
    %188 = vmatpush.bf16.msra.mxu0 %v173
    %189 = vmatpush.bf16.msra.mxu0 %v171
    %190 = vmatmul.bf16.gmra.mxu0 %v180
    %v191 = vpop.f32.mrf.mxu0
    %v192 = vadd.f32 0.0, %v191
    %v193 = vpop.f32.mrf.mxu0
    %v194 = vadd.f32 0.0, %v193
    %195 = vdwg.mxu0
    %196 = vmatpush.bf16.msra.mxu0 0
    %197 = vmatpush.bf16.msra.mxu0 0
    %198 = vmatpush.bf16.msra.mxu0 0
    %199 = vmatpush.bf16.msra.mxu0 0
    %200 = vmatpush.bf16.msra.mxu0 0
    %201 = vmatpush.bf16.msra.mxu0 0
    %202 = vmatpush.bf16.msra.mxu0 %v174
    %203 = vmatpush.bf16.msra.mxu0 %v172
    %204 = vmatmul.bf16.gmra.mxu0 %v180
    %v205 = vpop.f32.mrf.mxu0
    %v206 = vadd.f32 0.0, %v205
    %v207 = vpop.f32.mrf.mxu0
    %v208 = vadd.f32 0.0, %v207
    %209 = vdwg.mxu0
    %v210 = vld [vmem:[#allocation8] sm:$0xff]
    %v211 = vld [vmem:[#allocation8 + $0x8] sm:$0xff]
    %v212 = vld [vmem:[#allocation10] sm:$0xff]
    %v213 = vld [vmem:[#allocation10 + $0x8] sm:$0xff]
    %216 = vrot.lane.b32.xlu0 %v192, 112
    %v217 = vpop.permute.xlu0 %216
    %218 = vrot.lane.b32.xlu0 %v194, 112
    %v219 = vpop.permute.xlu0 %218
    %v222 = vrot.slane %v192, 4
    %vm223 = vcmask 1047556
    %v224 = vsel %vm223, 0.0, %v222
    %v226 = vunpack.c.l.s4 1983009808
    %v227 = vunpack.c.0.s8 %v226
    %v228 = vperm.slane %v192, %v227
    %v230 = vunpack.c.l.s4 1983009808
    %v231 = vunpack.c.0.s8 %v230
    %v232 = vperm.slane %v224, %v231
    %v233 = vrot.slane %v217, 4
    %v234 = vsel %vm223, 0.0, %v233
    %v236 = vunpack.c.l.s4 1983009808
    %v237 = vunpack.c.0.s8 %v236
    %v238 = vperm.slane %v217, %v237
    %v240 = vunpack.c.l.s4 1983009808
    %v241 = vunpack.c.0.s8 %v240
    %v242 = vperm.slane %v234, %v241
    %v243 = vrot.slane %v238, 4
    %v244 = vsel %vm223, %v243, %v228
    %v245 = vrot.slane %v228, 4
    %v246 = vsel %vm223, %v238, %v245
    %v248 = vunpack.c.l.s4 1934713408
    %v249 = vunpack.c.0.s8 %v248
    %v250 = vperm.slane %v244, %v249
    %v252 = vunpack.c.l.s4 1934713408
    %v253 = vunpack.c.0.s8 %v252
    %v254 = vperm.slane %v246, %v253
    %v255 = vrot.slane %v242, 4
    %v256 = vsel %vm223, %v255, %v232
    %v257 = vrot.slane %v232, 4
    %v258 = vsel %vm223, %v242, %v257
    %v260 = vunpack.c.l.s4 1934713408
    %v261 = vunpack.c.0.s8 %v260
    %v262 = vperm.slane %v256, %v261
    %v264 = vunpack.c.l.s4 1934713408
    %v265 = vunpack.c.0.s8 %v264
    %v266 = vperm.slane %v258, %v265
    %v267 = vrot.slane %v250, 4
    %v268 = vsel %vm223, 0.0, %v267
    %v269 = vrot.slane %v254, 4
    %v270 = vsel %vm223, 0.0, %v269
    %v271 = vrot.slane %v262, 4
    %v272 = vsel %vm223, 0.0, %v271
    %v273 = vrot.slane %v266, 4
    %v274 = vsel %vm223, 0.0, %v273
    %v275 = vrot.slane %v194, 4
    %v276 = vsel %vm223, 0.0, %v275
    %v278 = vunpack.c.l.s4 1983009808
    %v279 = vunpack.c.0.s8 %v278
    %v280 = vperm.slane %v194, %v279
    %v282 = vunpack.c.l.s4 1983009808
    %v283 = vunpack.c.0.s8 %v282
    %v284 = vperm.slane %v276, %v283
    %v285 = vrot.slane %v219, 4
    %v286 = vsel %vm223, 0.0, %v285
    %v288 = vunpack.c.l.s4 1983009808
    %v289 = vunpack.c.0.s8 %v288
    %v290 = vperm.slane %v219, %v289
    %v292 = vunpack.c.l.s4 1983009808
    %v293 = vunpack.c.0.s8 %v292
    %v294 = vperm.slane %v286, %v293
    %v295 = vrot.slane %v290, 4
    %v296 = vsel %vm223, %v295, %v280
    %v297 = vrot.slane %v280, 4
    %v298 = vsel %vm223, %v290, %v297
    %v300 = vunpack.c.l.s4 1934713408
    %v301 = vunpack.c.0.s8 %v300
    %v302 = vperm.slane %v296, %v301
    %v304 = vunpack.c.l.s4 1934713408
    %v305 = vunpack.c.0.s8 %v304
    %v306 = vperm.slane %v298, %v305
    %v307 = vrot.slane %v294, 4
    %v308 = vsel %vm223, %v307, %v284
    %v309 = vrot.slane %v284, 4
    %v310 = vsel %vm223, %v294, %v309
    %v312 = vunpack.c.l.s4 1934713408
    %v313 = vunpack.c.0.s8 %v312
    %v314 = vperm.slane %v308, %v313
    %v316 = vunpack.c.l.s4 1934713408
    %v317 = vunpack.c.0.s8 %v316
    %v318 = vperm.slane %v310, %v317
    %v319 = vrot.slane %v302, 4
    %v320 = vsel %vm223, 0.0, %v319
    %v321 = vrot.slane %v306, 4
    %v322 = vsel %vm223, 0.0, %v321
    %v323 = vrot.slane %v314, 4
    %v324 = vsel %vm223, 0.0, %v323
    %v325 = vrot.slane %v318, 4
    %v326 = vsel %vm223, 0.0, %v325
    %343 = vrot.lane.b32.xlu0 %v250, 120
    %v344 = vpop.permute.xlu0 %343
    %345 = vrot.lane.b32.xlu0 %v268, 120
    %v346 = vpop.permute.xlu0 %345
    %347 = vrot.lane.b32.xlu0 %v254, 120
    %v348 = vpop.permute.xlu0 %347
    %349 = vrot.lane.b32.xlu0 %v270, 120
    %v350 = vpop.permute.xlu0 %349
    %351 = vrot.lane.b32.xlu0 %v262, 120
    %v352 = vpop.permute.xlu0 %351
    %353 = vrot.lane.b32.xlu0 %v272, 120
    %v354 = vpop.permute.xlu0 %353
    %355 = vrot.lane.b32.xlu0 %v266, 120
    %v356 = vpop.permute.xlu0 %355
    %357 = vrot.lane.b32.xlu0 %v274, 120
    %v358 = vpop.permute.xlu0 %357
    %359 = vrot.lane.b32.xlu0 %v302, 120
    %v360 = vpop.permute.xlu0 %359
    %361 = vrot.lane.b32.xlu0 %v320, 120
    %v362 = vpop.permute.xlu0 %361
    %363 = vrot.lane.b32.xlu0 %v306, 120
    %v364 = vpop.permute.xlu0 %363
    %365 = vrot.lane.b32.xlu0 %v322, 120
    %v366 = vpop.permute.xlu0 %365
    %367 = vrot.lane.b32.xlu0 %v314, 120
    %v368 = vpop.permute.xlu0 %367
    %369 = vrot.lane.b32.xlu0 %v324, 120
    %v370 = vpop.permute.xlu0 %369
    %371 = vrot.lane.b32.xlu0 %v318, 120
    %v372 = vpop.permute.xlu0 %371
    %373 = vrot.lane.b32.xlu0 %v326, 120
    %v374 = vpop.permute.xlu0 %373
    %391 = vrot.lane.b32.xlu0 %v250, 8
    %v392 = vpop.permute.xlu0 %391
    %393 = vrot.lane.b32.xlu0 %v268, 8
    %v394 = vpop.permute.xlu0 %393
    %395 = vrot.lane.b32.xlu0 %v254, 8
    %v396 = vpop.permute.xlu0 %395
    %397 = vrot.lane.b32.xlu0 %v270, 8
    %v398 = vpop.permute.xlu0 %397
    %399 = vrot.lane.b32.xlu0 %v262, 8
    %v400 = vpop.permute.xlu0 %399
    %401 = vrot.lane.b32.xlu0 %v272, 8
    %v402 = vpop.permute.xlu0 %401
    %403 = vrot.lane.b32.xlu0 %v266, 8
    %v404 = vpop.permute.xlu0 %403
    %405 = vrot.lane.b32.xlu0 %v274, 8
    %v406 = vpop.permute.xlu0 %405
    %407 = vrot.lane.b32.xlu0 %v302, 8
    %v408 = vpop.permute.xlu0 %407
    %409 = vrot.lane.b32.xlu0 %v320, 8
    %v410 = vpop.permute.xlu0 %409
    %411 = vrot.lane.b32.xlu0 %v306, 8
    %v412 = vpop.permute.xlu0 %411
    %413 = vrot.lane.b32.xlu0 %v322, 8
    %v414 = vpop.permute.xlu0 %413
    %415 = vrot.lane.b32.xlu0 %v314, 8
    %v416 = vpop.permute.xlu0 %415
    %417 = vrot.lane.b32.xlu0 %v324, 8
    %v418 = vpop.permute.xlu0 %417
    %419 = vrot.lane.b32.xlu0 %v318, 8
    %v420 = vpop.permute.xlu0 %419
    %421 = vrot.lane.b32.xlu0 %v326, 8
    %v422 = vpop.permute.xlu0 %421
    %vm439 = vcmask 64512
    %v440 = vsel %vm439, %v344, %v392
    %v441 = vsel %vm439, %v346, %v394
    %v442 = vsel %vm439, %v348, %v396
    %v443 = vsel %vm439, %v350, %v398
    %v444 = vsel %vm439, %v352, %v400
    %v445 = vsel %vm439, %v354, %v402
    %v446 = vsel %vm439, %v356, %v404
    %v447 = vsel %vm439, %v358, %v406
    %v448 = vsel %vm439, %v360, %v408
    %v449 = vsel %vm439, %v362, %v410
    %v450 = vsel %vm439, %v364, %v412
    %v451 = vsel %vm439, %v366, %v414
    %v452 = vsel %vm439, %v368, %v416
    %v453 = vsel %vm439, %v370, %v418
    %v454 = vsel %vm439, %v372, %v420
    %v455 = vsel %vm439, %v374, %v422
    %v458 = vrot.slane %v210, 1
    %v459 = vrot.slane %v210, 2
    %v460 = vrot.slane %v210, 3
    %v461 = vrot.slane %v210, 4
    %v462 = vrot.slane %v210, 5
    %v463 = vrot.slane %v210, 6
    %v464 = vrot.slane %v210, 7
    %v465 = vrot.slane %v211, 1
    %v466 = vrot.slane %v211, 2
    %v467 = vrot.slane %v211, 3
    %v468 = vrot.slane %v211, 4
    %v469 = vrot.slane %v211, 5
    %v470 = vrot.slane %v211, 6
    %v471 = vrot.slane %v211, 7
    %v472 = vperm.slane %v210, 0
    %v473 = vperm.slane %v458, 0
    %v474 = vperm.slane %v459, 0
    %v475 = vperm.slane %v460, 0
    %v476 = vperm.slane %v461, 0
    %v477 = vperm.slane %v462, 0
    %v478 = vperm.slane %v463, 0
    %v479 = vperm.slane %v464, 0
    %v480 = vperm.slane %v211, 0
    %v481 = vperm.slane %v465, 0
    %v482 = vperm.slane %v466, 0
    %v483 = vperm.slane %v467, 0
    %v484 = vperm.slane %v468, 0
    %v485 = vperm.slane %v469, 0
    %v486 = vperm.slane %v470, 0
    %v487 = vperm.slane %v471, 0
    %v504 = vmul.f32 %v250, %v472
    %v505 = vmul.f32 %v268, %v473
    %v506 = vmul.f32 %v254, %v474
    %v507 = vmul.f32 %v270, %v475
    %v508 = vmul.f32 %v262, %v476
    %v509 = vmul.f32 %v272, %v477
    %v510 = vmul.f32 %v266, %v478
    %v511 = vmul.f32 %v274, %v479
    %v512 = vmul.f32 %v302, %v480
    %v513 = vmul.f32 %v320, %v481
    %v514 = vmul.f32 %v306, %v482
    %v515 = vmul.f32 %v322, %v483
    %v516 = vmul.f32 %v314, %v484
    %v517 = vmul.f32 %v324, %v485
    %v518 = vmul.f32 %v318, %v486
    %v519 = vmul.f32 %v326, %v487
    %v522 = vrot.slane %v212, 1
    %v523 = vrot.slane %v212, 2
    %v524 = vrot.slane %v212, 3
    %v525 = vrot.slane %v212, 4
    %v526 = vrot.slane %v212, 5
    %v527 = vrot.slane %v212, 6
    %v528 = vrot.slane %v212, 7
    %v529 = vrot.slane %v213, 1
    %v530 = vrot.slane %v213, 2
    %v531 = vrot.slane %v213, 3
    %v532 = vrot.slane %v213, 4
    %v533 = vrot.slane %v213, 5
    %v534 = vrot.slane %v213, 6
    %v535 = vrot.slane %v213, 7
    %v536 = vperm.slane %v212, 0
    %v537 = vperm.slane %v522, 0
    %v538 = vperm.slane %v523, 0
    %v539 = vperm.slane %v524, 0
    %v540 = vperm.slane %v525, 0
    %v541 = vperm.slane %v526, 0
    %v542 = vperm.slane %v527, 0
    %v543 = vperm.slane %v528, 0
    %v544 = vperm.slane %v213, 0
    %v545 = vperm.slane %v529, 0
    %v546 = vperm.slane %v530, 0
    %v547 = vperm.slane %v531, 0
    %v548 = vperm.slane %v532, 0
    %v549 = vperm.slane %v533, 0
    %v550 = vperm.slane %v534, 0
    %v551 = vperm.slane %v535, 0
    %v568 = vmul.f32 %v440, %v536
    %v569 = vmul.f32 %v441, %v537
    %v570 = vmul.f32 %v442, %v538
    %v571 = vmul.f32 %v443, %v539
    %v572 = vmul.f32 %v444, %v540
    %v573 = vmul.f32 %v445, %v541
    %v574 = vmul.f32 %v446, %v542
    %v575 = vmul.f32 %v447, %v543
    %v576 = vmul.f32 %v448, %v544
    %v577 = vmul.f32 %v449, %v545
    %v578 = vmul.f32 %v450, %v546
    %v579 = vmul.f32 %v451, %v547
    %v580 = vmul.f32 %v452, %v548
    %v581 = vmul.f32 %v453, %v549
    %v582 = vmul.f32 %v454, %v550
    %v583 = vmul.f32 %v455, %v551
    %v584 = vadd.f32 %v504, %v568
    %v585 = vadd.f32 %v505, %v569
    %v586 = vadd.f32 %v506, %v570
    %v587 = vadd.f32 %v507, %v571
    %v588 = vadd.f32 %v508, %v572
    %v589 = vadd.f32 %v509, %v573
    %v590 = vadd.f32 %v510, %v574
    %v591 = vadd.f32 %v511, %v575
    %v592 = vadd.f32 %v512, %v576
    %v593 = vadd.f32 %v513, %v577
    %v594 = vadd.f32 %v514, %v578
    %v595 = vadd.f32 %v515, %v579
    %v596 = vadd.f32 %v516, %v580
    %v597 = vadd.f32 %v517, %v581
    %v598 = vadd.f32 %v518, %v582
    %v599 = vadd.f32 %v519, %v583
    %v600 = vrot.slane %v586, 4
    %v601 = vsel %vm223, %v600, %v584
    %v603 = vunpack.c.l.s4 1983009808
    %v604 = vunpack.c.0.s8 %v603
    %v605 = vperm.slane %v601, %v604
    %v606 = vrot.slane %v587, 4
    %v607 = vsel %vm223, %v606, %v585
    %v609 = vunpack.c.l.s4 1983009808
    %v610 = vunpack.c.0.s8 %v609
    %v611 = vperm.slane %v607, %v610
    %v612 = vrot.slane %v590, 4
    %v613 = vsel %vm223, %v612, %v588
    %v615 = vunpack.c.l.s4 1983009808
    %v616 = vunpack.c.0.s8 %v615
    %v617 = vperm.slane %v613, %v616
    %v618 = vrot.slane %v591, 4
    %v619 = vsel %vm223, %v618, %v589
    %v621 = vunpack.c.l.s4 1983009808
    %v622 = vunpack.c.0.s8 %v621
    %v623 = vperm.slane %v619, %v622
    %v624 = vrot.slane %v611, 4
    %v625 = vsel %vm223, %v624, %v605
    %v627 = vunpack.c.l.s4 1934713408
    %v628 = vunpack.c.0.s8 %v627
    %v629 = vperm.slane %v625, %v628
    %v630 = vrot.slane %v623, 4
    %v631 = vsel %vm223, %v630, %v617
    %v633 = vunpack.c.l.s4 1934713408
    %v634 = vunpack.c.0.s8 %v633
    %v635 = vperm.slane %v631, %v634
    %v636 = vrot.slane %v635, 4
    %v637 = vsel %vm223, %v636, %v629
    %v638 = vrot.slane %v629, 4
    %v639 = vsel %vm223, %v635, %v638
    %v640 = vrot.slane %v594, 4
    %v641 = vsel %vm223, %v640, %v592
    %v643 = vunpack.c.l.s4 1983009808
    %v644 = vunpack.c.0.s8 %v643
    %v645 = vperm.slane %v641, %v644
    %v646 = vrot.slane %v595, 4
    %v647 = vsel %vm223, %v646, %v593
    %v649 = vunpack.c.l.s4 1983009808
    %v650 = vunpack.c.0.s8 %v649
    %v651 = vperm.slane %v647, %v650
    %v652 = vrot.slane %v598, 4
    %v653 = vsel %vm223, %v652, %v596
    %v655 = vunpack.c.l.s4 1983009808
    %v656 = vunpack.c.0.s8 %v655
    %v657 = vperm.slane %v653, %v656
    %v658 = vrot.slane %v599, 4
    %v659 = vsel %vm223, %v658, %v597
    %v661 = vunpack.c.l.s4 1983009808
    %v662 = vunpack.c.0.s8 %v661
    %v663 = vperm.slane %v659, %v662
    %v664 = vrot.slane %v651, 4
    %v665 = vsel %vm223, %v664, %v645
    %v667 = vunpack.c.l.s4 1934713408
    %v668 = vunpack.c.0.s8 %v667
    %v669 = vperm.slane %v665, %v668
    %v670 = vrot.slane %v663, 4
    %v671 = vsel %vm223, %v670, %v657
    %v673 = vunpack.c.l.s4 1934713408
    %v674 = vunpack.c.0.s8 %v673
    %v675 = vperm.slane %v671, %v674
    %v676 = vrot.slane %v675, 4
    %v677 = vsel %vm223, %v676, %v669
    %v678 = vrot.slane %v669, 4
    %v679 = vsel %vm223, %v675, %v678
    %682 = vrot.lane.b32.xlu0 %v639, 16
    %v683 = vpop.permute.xlu0 %682
    %684 = vrot.lane.b32.xlu0 %v679, 16
    %v685 = vpop.permute.xlu0 %684
    %vm688 = vcmask 130048
    %v689 = vsel %vm688, %v637, %v683
    %v690 = vsel %vm688, %v677, %v685
    %v691 = vpack.c.bf16 %v689, %v689
    %v692 = vpack.c.bf16 %v690, %v690
    %vm693 = vcmask 257024
    %694 = vst.msk [vmem:[#allocation11] sm:$0xf] %vm693, %v691
    %695 = vst.msk [vmem:[#allocation11 + $0x4] sm:$0xf] %vm693, %v692
    %696 = vrot.lane.b32.xlu0 %v192, 96
    %v697 = vpop.permute.xlu0 %696
    %698 = vrot.lane.b32.xlu0 %v194, 96
    %v699 = vpop.permute.xlu0 %698
    %700 = vrot.lane.b32.xlu0 %v217, 96
    %v701 = vpop.permute.xlu0 %700
    %702 = vrot.lane.b32.xlu0 %v219, 96
    %v703 = vpop.permute.xlu0 %702
    %v708 = vrot.slane %v697, 4
    %v709 = vsel %vm223, 0.0, %v708
    %v711 = vunpack.c.l.s4 1983009808
    %v712 = vunpack.c.0.s8 %v711
    %v713 = vperm.slane %v697, %v712
    %v715 = vunpack.c.l.s4 1983009808
    %v716 = vunpack.c.0.s8 %v715
    %v717 = vperm.slane %v709, %v716
    %v718 = vrot.slane %v701, 4
    %v719 = vsel %vm223, 0.0, %v718
    %v721 = vunpack.c.l.s4 1983009808
    %v722 = vunpack.c.0.s8 %v721
    %v723 = vperm.slane %v701, %v722
    %v725 = vunpack.c.l.s4 1983009808
    %v726 = vunpack.c.0.s8 %v725
    %v727 = vperm.slane %v719, %v726
    %v728 = vrot.slane %v723, 4
    %v729 = vsel %vm223, %v728, %v713
    %v730 = vrot.slane %v713, 4
    %v731 = vsel %vm223, %v723, %v730
    %v733 = vunpack.c.l.s4 1934713408
    %v734 = vunpack.c.0.s8 %v733
    %v735 = vperm.slane %v729, %v734
    %v737 = vunpack.c.l.s4 1934713408
    %v738 = vunpack.c.0.s8 %v737
    %v739 = vperm.slane %v731, %v738
    %v740 = vrot.slane %v727, 4
    %v741 = vsel %vm223, %v740, %v717
    %v742 = vrot.slane %v717, 4
    %v743 = vsel %vm223, %v727, %v742
    %v745 = vunpack.c.l.s4 1934713408
    %v746 = vunpack.c.0.s8 %v745
    %v747 = vperm.slane %v741, %v746
    %v749 = vunpack.c.l.s4 1934713408
    %v750 = vunpack.c.0.s8 %v749
    %v751 = vperm.slane %v743, %v750
    %v752 = vrot.slane %v735, 4
    %v753 = vsel %vm223, 0.0, %v752
    %v754 = vrot.slane %v739, 4
    %v755 = vsel %vm223, 0.0, %v754
    %v756 = vrot.slane %v747, 4
    %v757 = vsel %vm223, 0.0, %v756
    %v758 = vrot.slane %v751, 4
    %v759 = vsel %vm223, 0.0, %v758
    %v760 = vrot.slane %v699, 4
    %v761 = vsel %vm223, 0.0, %v760
    %v763 = vunpack.c.l.s4 1983009808
    %v764 = vunpack.c.0.s8 %v763
    %v765 = vperm.slane %v699, %v764
    %v767 = vunpack.c.l.s4 1983009808
    %v768 = vunpack.c.0.s8 %v767
    %v769 = vperm.slane %v761, %v768
    %v770 = vrot.slane %v703, 4
    %v771 = vsel %vm223, 0.0, %v770
    %v773 = vunpack.c.l.s4 1983009808
    %v774 = vunpack.c.0.s8 %v773
    %v775 = vperm.slane %v703, %v774
    %v777 = vunpack.c.l.s4 1983009808
    %v778 = vunpack.c.0.s8 %v777
    %v779 = vperm.slane %v771, %v778
    %v780 = vrot.slane %v775, 4
    %v781 = vsel %vm223, %v780, %v765
    %v782 = vrot.slane %v765, 4
    %v783 = vsel %vm223, %v775, %v782
    %v785 = vunpack.c.l.s4 1934713408
    %v786 = vunpack.c.0.s8 %v785
    %v787 = vperm.slane %v781, %v786
    %v789 = vunpack.c.l.s4 1934713408
    %v790 = vunpack.c.0.s8 %v789
    %v791 = vperm.slane %v783, %v790
    %v792 = vrot.slane %v779, 4
    %v793 = vsel %vm223, %v792, %v769
    %v794 = vrot.slane %v769, 4
    %v795 = vsel %vm223, %v779, %v794
    %v797 = vunpack.c.l.s4 1934713408
    %v798 = vunpack.c.0.s8 %v797
    %v799 = vperm.slane %v793, %v798
    %v801 = vunpack.c.l.s4 1934713408
    %v802 = vunpack.c.0.s8 %v801
    %v803 = vperm.slane %v795, %v802
    %v804 = vrot.slane %v787, 4
    %v805 = vsel %vm223, 0.0, %v804
    %v806 = vrot.slane %v791, 4
    %v807 = vsel %vm223, 0.0, %v806
    %v808 = vrot.slane %v799, 4
    %v809 = vsel %vm223, 0.0, %v808
    %v810 = vrot.slane %v803, 4
    %v811 = vsel %vm223, 0.0, %v810
    %828 = vrot.lane.b32.xlu0 %v735, 120
    %v829 = vpop.permute.xlu0 %828
    %830 = vrot.lane.b32.xlu0 %v753, 120
    %v831 = vpop.permute.xlu0 %830
    %832 = vrot.lane.b32.xlu0 %v739, 120
    %v833 = vpop.permute.xlu0 %832
    %834 = vrot.lane.b32.xlu0 %v755, 120
    %v835 = vpop.permute.xlu0 %834
    %836 = vrot.lane.b32.xlu0 %v747, 120
    %v837 = vpop.permute.xlu0 %836
    %838 = vrot.lane.b32.xlu0 %v757, 120
    %v839 = vpop.permute.xlu0 %838
    %840 = vrot.lane.b32.xlu0 %v751, 120
    %v841 = vpop.permute.xlu0 %840
    %842 = vrot.lane.b32.xlu0 %v759, 120
    %v843 = vpop.permute.xlu0 %842
    %844 = vrot.lane.b32.xlu0 %v787, 120
    %v845 = vpop.permute.xlu0 %844
    %846 = vrot.lane.b32.xlu0 %v805, 120
    %v847 = vpop.permute.xlu0 %846
    %848 = vrot.lane.b32.xlu0 %v791, 120
    %v849 = vpop.permute.xlu0 %848
    %850 = vrot.lane.b32.xlu0 %v807, 120
    %v851 = vpop.permute.xlu0 %850
    %852 = vrot.lane.b32.xlu0 %v799, 120
    %v853 = vpop.permute.xlu0 %852
    %854 = vrot.lane.b32.xlu0 %v809, 120
    %v855 = vpop.permute.xlu0 %854
    %856 = vrot.lane.b32.xlu0 %v803, 120
    %v857 = vpop.permute.xlu0 %856
    %858 = vrot.lane.b32.xlu0 %v811, 120
    %v859 = vpop.permute.xlu0 %858
    %876 = vrot.lane.b32.xlu0 %v735, 8
    %v877 = vpop.permute.xlu0 %876
    %878 = vrot.lane.b32.xlu0 %v753, 8
    %v879 = vpop.permute.xlu0 %878
    %880 = vrot.lane.b32.xlu0 %v739, 8
    %v881 = vpop.permute.xlu0 %880
    %882 = vrot.lane.b32.xlu0 %v755, 8
    %v883 = vpop.permute.xlu0 %882
    %884 = vrot.lane.b32.xlu0 %v747, 8
    %v885 = vpop.permute.xlu0 %884
    %886 = vrot.lane.b32.xlu0 %v757, 8
    %v887 = vpop.permute.xlu0 %886
    %888 = vrot.lane.b32.xlu0 %v751, 8
    %v889 = vpop.permute.xlu0 %888
    %890 = vrot.lane.b32.xlu0 %v759, 8
    %v891 = vpop.permute.xlu0 %890
    %892 = vrot.lane.b32.xlu0 %v787, 8
    %v893 = vpop.permute.xlu0 %892
    %894 = vrot.lane.b32.xlu0 %v805, 8
    %v895 = vpop.permute.xlu0 %894
    %896 = vrot.lane.b32.xlu0 %v791, 8
    %v897 = vpop.permute.xlu0 %896
    %898 = vrot.lane.b32.xlu0 %v807, 8
    %v899 = vpop.permute.xlu0 %898
    %900 = vrot.lane.b32.xlu0 %v799, 8
    %v901 = vpop.permute.xlu0 %900
    %902 = vrot.lane.b32.xlu0 %v809, 8
    %v903 = vpop.permute.xlu0 %902
    %904 = vrot.lane.b32.xlu0 %v803, 8
    %v905 = vpop.permute.xlu0 %904
    %906 = vrot.lane.b32.xlu0 %v811, 8
    %v907 = vpop.permute.xlu0 %906
    %v924 = vsel %vm439, %v829, %v877
    %v925 = vsel %vm439, %v831, %v879
    %v926 = vsel %vm439, %v833, %v881
    %v927 = vsel %vm439, %v835, %v883
    %v928 = vsel %vm439, %v837, %v885
    %v929 = vsel %vm439, %v839, %v887
    %v930 = vsel %vm439, %v841, %v889
    %v931 = vsel %vm439, %v843, %v891
    %v932 = vsel %vm439, %v845, %v893
    %v933 = vsel %vm439, %v847, %v895
    %v934 = vsel %vm439, %v849, %v897
    %v935 = vsel %vm439, %v851, %v899
    %v936 = vsel %vm439, %v853, %v901
    %v937 = vsel %vm439, %v855, %v903
    %v938 = vsel %vm439, %v857, %v905
    %v939 = vsel %vm439, %v859, %v907
    %v940 = vmul.f32 %v735, %v472
    %v941 = vmul.f32 %v753, %v473
    %v942 = vmul.f32 %v739, %v474
    %v943 = vmul.f32 %v755, %v475
    %v944 = vmul.f32 %v747, %v476
    %v945 = vmul.f32 %v757, %v477
    %v946 = vmul.f32 %v751, %v478
    %v947 = vmul.f32 %v759, %v479
    %v948 = vmul.f32 %v787, %v480
    %v949 = vmul.f32 %v805, %v481
    %v950 = vmul.f32 %v791, %v482
    %v951 = vmul.f32 %v807, %v483
    %v952 = vmul.f32 %v799, %v484
    %v953 = vmul.f32 %v809, %v485
    %v954 = vmul.f32 %v803, %v486
    %v955 = vmul.f32 %v811, %v487
    %v956 = vmul.f32 %v924, %v536
    %v957 = vmul.f32 %v925, %v537
    %v958 = vmul.f32 %v926, %v538
    %v959 = vmul.f32 %v927, %v539
    %v960 = vmul.f32 %v928, %v540
    %v961 = vmul.f32 %v929, %v541
    %v962 = vmul.f32 %v930, %v542
    %v963 = vmul.f32 %v931, %v543
    %v964 = vmul.f32 %v932, %v544
    %v965 = vmul.f32 %v933, %v545
    %v966 = vmul.f32 %v934, %v546
    %v967 = vmul.f32 %v935, %v547
    %v968 = vmul.f32 %v936, %v548
    %v969 = vmul.f32 %v937, %v549
    %v970 = vmul.f32 %v938, %v550
    %v971 = vmul.f32 %v939, %v551
    %v972 = vadd.f32 %v940, %v956
    %v973 = vadd.f32 %v941, %v957
    %v974 = vadd.f32 %v942, %v958
    %v975 = vadd.f32 %v943, %v959
    %v976 = vadd.f32 %v944, %v960
    %v977 = vadd.f32 %v945, %v961
    %v978 = vadd.f32 %v946, %v962
    %v979 = vadd.f32 %v947, %v963
    %v980 = vadd.f32 %v948, %v964
    %v981 = vadd.f32 %v949, %v965
    %v982 = vadd.f32 %v950, %v966
    %v983 = vadd.f32 %v951, %v967
    %v984 = vadd.f32 %v952, %v968
    %v985 = vadd.f32 %v953, %v969
    %v986 = vadd.f32 %v954, %v970
    %v987 = vadd.f32 %v955, %v971
    %v988 = vrot.slane %v974, 4
    %v989 = vsel %vm223, %v988, %v972
    %v991 = vunpack.c.l.s4 1983009808
    %v992 = vunpack.c.0.s8 %v991
    %v993 = vperm.slane %v989, %v992
    %v994 = vrot.slane %v975, 4
    %v995 = vsel %vm223, %v994, %v973
    %v997 = vunpack.c.l.s4 1983009808
    %v998 = vunpack.c.0.s8 %v997
    %v999 = vperm.slane %v995, %v998
    %v1000 = vrot.slane %v978, 4
    %v1001 = vsel %vm223, %v1000, %v976
    %v1003 = vunpack.c.l.s4 1983009808
    %v1004 = vunpack.c.0.s8 %v1003
    %v1005 = vperm.slane %v1001, %v1004
    %v1006 = vrot.slane %v979, 4
    %v1007 = vsel %vm223, %v1006, %v977
    %v1009 = vunpack.c.l.s4 1983009808
    %v1010 = vunpack.c.0.s8 %v1009
    %v1011 = vperm.slane %v1007, %v1010
    %v1012 = vrot.slane %v999, 4
    %v1013 = vsel %vm223, %v1012, %v993
    %v1015 = vunpack.c.l.s4 1934713408
    %v1016 = vunpack.c.0.s8 %v1015
    %v1017 = vperm.slane %v1013, %v1016
    %v1018 = vrot.slane %v1011, 4
    %v1019 = vsel %vm223, %v1018, %v1005
    %v1021 = vunpack.c.l.s4 1934713408
    %v1022 = vunpack.c.0.s8 %v1021
    %v1023 = vperm.slane %v1019, %v1022
    %v1024 = vrot.slane %v1023, 4
    %v1025 = vsel %vm223, %v1024, %v1017
    %v1026 = vrot.slane %v1017, 4
    %v1027 = vsel %vm223, %v1023, %v1026
    %v1028 = vrot.slane %v982, 4
    %v1029 = vsel %vm223, %v1028, %v980
    %v1031 = vunpack.c.l.s4 1983009808
    %v1032 = vunpack.c.0.s8 %v1031
    %v1033 = vperm.slane %v1029, %v1032
    %v1034 = vrot.slane %v983, 4
    %v1035 = vsel %vm223, %v1034, %v981
    %v1037 = vunpack.c.l.s4 1983009808
    %v1038 = vunpack.c.0.s8 %v1037
    %v1039 = vperm.slane %v1035, %v1038
    %v1040 = vrot.slane %v986, 4
    %v1041 = vsel %vm223, %v1040, %v984
    %v1043 = vunpack.c.l.s4 1983009808
    %v1044 = vunpack.c.0.s8 %v1043
    %v1045 = vperm.slane %v1041, %v1044
    %v1046 = vrot.slane %v987, 4
    %v1047 = vsel %vm223, %v1046, %v985
    %v1049 = vunpack.c.l.s4 1983009808
    %v1050 = vunpack.c.0.s8 %v1049
    %v1051 = vperm.slane %v1047, %v1050
    %v1052 = vrot.slane %v1039, 4
    %v1053 = vsel %vm223, %v1052, %v1033
    %v1055 = vunpack.c.l.s4 1934713408
    %v1056 = vunpack.c.0.s8 %v1055
    %v1057 = vperm.slane %v1053, %v1056
    %v1058 = vrot.slane %v1051, 4
    %v1059 = vsel %vm223, %v1058, %v1045
    %v1061 = vunpack.c.l.s4 1934713408
    %v1062 = vunpack.c.0.s8 %v1061
    %v1063 = vperm.slane %v1059, %v1062
    %v1064 = vrot.slane %v1063, 4
    %v1065 = vsel %vm223, %v1064, %v1057
    %v1066 = vrot.slane %v1057, 4
    %v1067 = vsel %vm223, %v1063, %v1066
    %1070 = vrot.lane.b32.xlu0 %v1027, 16
    %v1071 = vpop.permute.xlu0 %1070
    %1072 = vrot.lane.b32.xlu0 %v1067, 16
    %v1073 = vpop.permute.xlu0 %1072
    %v1076 = vsel %vm688, %v1025, %v1071
    %v1077 = vsel %vm688, %v1065, %v1073
    %v1078 = vpack.c.bf16 %v1076, %v1076
    %v1079 = vpack.c.bf16 %v1077, %v1077
    %1080 = vst.msk [vmem:[#allocation12] sm:$0xf] %vm693, %v1078
    %1081 = vst.msk [vmem:[#allocation12 + $0x4] sm:$0xf] %vm693, %v1079
    %v1082 = vpack.c.bf16 %v192, %v192
    %v1083 = vpack.c.bf16 %v194, %v194
    %1086 = vrot.lane.b32.xlu0 %v1082, 64
    %v1087 = vpop.permute.xlu0 %1086
    %1088 = vrot.lane.b32.xlu0 %v1083, 64
    %v1089 = vpop.permute.xlu0 %1088
    %vm1092 = vcmask 519168
    %1093 = vst.msk [vmem:[#allocation14] sm:$0xf] %vm1092, %v1087
    %1094 = vst.msk [vmem:[#allocation14 + $0x4] sm:$0xf] %vm1092, %v1089
    %v1095 = vpack.c.bf16 %v206, %v206
    %v1096 = vpack.c.bf16 %v208, %v208
    %1097 = vst.msk [vmem:[#allocation15] sm:$0xf] %vm1092, %v1095
    %1098 = vst.msk [vmem:[#allocation15 + $0x4] sm:$0xf] %vm1092, %v1096
    // Predicated region
    $region42: #{tpu_custom_call.1} parent=1 // pred_check
      _
    $region43: #{tpu_custom_call.1} parent=1 // pred_check_branch
      %1100 = sbr.rel (0) target = $region45
    $region44: #{tpu_custom_call.1} parent=1 // pred_region
      %1102 = vsyncadd [#allocation4], 0
      %s1103 = sshll.u32 [#allocation11], 4
      %s1104 = int_to_ptr.vmem [resolvable:$true] %s1103
      %s1105 = sshll.u32 %s5, 4
      %s1106 = int_to_ptr.hbm [resolvable:$true] %s1105
      %1111 = dma.vmem_to_hbm [thread:$0]  %s1104, 128, %s1106, [#allocation4], 64, 64, 4
    $region45: #{tpu_custom_call.1} parent=1 // pred_fallthru
      _
    // Predicated region
    $region46: #{tpu_custom_call.1} parent=1 // pred_check
      _
    $region47: #{tpu_custom_call.1} parent=1 // pred_check_branch
      %1113 = sbr.rel (0) target = $region49
    $region48: #{tpu_custom_call.1} parent=1 // pred_region
      %1115 = vsyncadd [#allocation13], 0
      %s1116 = sshll.u32 [#allocation12], 4
      %s1117 = int_to_ptr.vmem [resolvable:$true] %s1116
      %s1118 = sshll.u32 %s6, 4
      %s1119 = int_to_ptr.hbm [resolvable:$true] %s1118
      %1124 = dma.vmem_to_hbm [thread:$0]  %s1117, 128, %s1119, [#allocation13], 64, 64, 4
    $region49: #{tpu_custom_call.1} parent=1 // pred_fallthru
      _
    // Predicated region
    $region50: #{tpu_custom_call.1} parent=1 // pred_check
      _
    $region51: #{tpu_custom_call.1} parent=1 // pred_check_branch
      %1126 = sbr.rel (0) target = $region53
    $region52: #{tpu_custom_call.1} parent=1 // pred_region
      %1128 = vsyncadd [#allocation13], 0
      %s1129 = sshll.u32 [#allocation14], 4
      %s1130 = int_to_ptr.vmem [resolvable:$true] %s1129
      %s1131 = sshll.u32 %s7, 4
      %s1132 = int_to_ptr.hbm [resolvable:$true] %s1131
      %1137 = dma.vmem_to_hbm [thread:$0]  %s1130, 128, %s1132, [#allocation13], 64, 64, 4
    $region53: #{tpu_custom_call.1} parent=1 // pred_fallthru
      _
    // Predicated region
    $region54: #{tpu_custom_call.1} parent=1 // pred_check
      _
    $region55: #{tpu_custom_call.1} parent=1 // pred_check_branch
      %1139 = sbr.rel (0) target = $region57
    $region56: #{tpu_custom_call.1} parent=1 // pred_region
      %1141 = vsyncadd [#allocation16], 0
      %s1142 = sshll.u32 [#allocation15], 4
      %s1143 = int_to_ptr.vmem [resolvable:$true] %s1142
      %s1144 = sshll.u32 %s8, 4
      %s1145 = int_to_ptr.hbm [resolvable:$true] %s1144
      %1150 = dma.vmem_to_hbm [thread:$0]  %s1143, 128, %s1145, [#allocation16], 64, 64, 4
    $region57: #{tpu_custom_call.1} parent=1 // pred_fallthru
      _
    // Predicated region
    $region58: #{tpu_custom_call.1} parent=1 // pred_check
      _
    $region59: #{tpu_custom_call.1} parent=1 // pred_check_branch
      %1152 = sbr.rel (0) target = $region61
    $region60: #{tpu_custom_call.1} parent=1 // pred_region
      %1154 = dma.done [#allocation4], 128
    $region61: #{tpu_custom_call.1} parent=1 // pred_fallthru
      _
    // Predicated region
    $region62: #{tpu_custom_call.1} parent=1 // pred_check
      _
    $region63: #{tpu_custom_call.1} parent=1 // pred_check_branch
      %1156 = sbr.rel (0) target = $region65
    $region64: #{tpu_custom_call.1} parent=1 // pred_region
      %1158 = dma.done [#allocation13], 128
    $region65: #{tpu_custom_call.1} parent=1 // pred_fallthru
      _
    // Predicated region
    $region66: #{tpu_custom_call.1} parent=1 // pred_check
      _
    $region67: #{tpu_custom_call.1} parent=1 // pred_check_branch
      %1160 = sbr.rel (0) target = $region69
    $region68: #{tpu_custom_call.1} parent=1 // pred_region
      %1162 = dma.done [#allocation13], 128
    $region69: #{tpu_custom_call.1} parent=1 // pred_fallthru
      _
    // Predicated region
    $region70: #{tpu_custom_call.1} parent=1 // pred_check
      _
    $region71: #{tpu_custom_call.1} parent=1 // pred_check_branch
      %1164 = sbr.rel (0) target = $region73
    $region72: #{tpu_custom_call.1} parent=1 // pred_region
      %1166 = dma.done [#allocation16], 128
    $region73: #{tpu_custom_call.1} parent=1 // pred_fallthru
      _
    %1167 = vsyncpa [#allocation3], 1
    %1168 = vsyncpa [#allocation6], 1
    %1169 = vsyncpa [#allocation9], 1
    %1170 = vsyncpa [#allocation4], 1
    %1171 = vsyncpa [#allocation13], 1
    %1172 = vsyncpa [#allocation16], 1

</llo_original>
